<compile_context>
chip_gen: v7x
topology: tpu7x:2x2x1
jax: 0.10.0
libtpu: 0.0.40
codegen_flags: <defaults>
</compile_context>

<pallas_src>
import jax
import jax.numpy as jnp
from jax.experimental import pallas as pl
from jax.experimental.pallas import tpu as pltpu


# ----------------------------------------------------------------------------
# Budget / tiling helpers
# ----------------------------------------------------------------------------
def _vmem_budgets():
    """(per-block byte budget, scoped vmem_limit_bytes), gated on chip VMEM."""
    vmem_bytes = 128 * 1024 * 1024
    try:
        vmem_bytes = int(pltpu.get_tpu_info().vmem_capacity_bytes)
    except Exception:
        pass
    if vmem_bytes <= 64 * 1024 * 1024:            # v7x-class: 64 MiB per TC
        return 4 * 1024 * 1024, 48 * 1024 * 1024
    return 8 * 1024 * 1024, 64 * 1024 * 1024      # v5e / v6e: 128 MiB


def _pick_block(n, c, hw_p, elem_bytes, block_budget):
    """Pick (bn, tile_hw) for blocks of shape (bn, C, tile_hw).

    hw_p is already a multiple of 128.  tile_hw = largest multiple-of-128
    divisor of hw_p that fits the budget at bn=1 (lane-dense DMAs); bn then
    packs extra batch elements (helps small-C layers), capped so the stats
    grid keeps >= 2 batch blocks when N >= 2 (both v7x TensorCores get work).
    """
    lane_divs = [t for t in range(128, hw_p + 1, 128) if hw_p % t == 0]
    cap_lanes = max(128, block_budget // max(1, c * elem_bytes))
    fitting = [t for t in lane_divs if t <= cap_lanes]
    tile_hw = fitting[-1] if fitting else lane_divs[0]
    # TODO(synk): tile the channel axis too when C alone blows the block budget.
    bn_cap = max(1, block_budget // max(1, c * tile_hw * elem_bytes))
    bn_cap = min(bn_cap, n // 2 if n >= 2 else n)
    bn = max([b for b in range(1, n + 1) if n % b == 0 and b <= bn_cap] or [1])
    return bn, tile_hw


# ----------------------------------------------------------------------------
# Kernel 1: per-batch-block partial stats.  Accumulates sum / sum-of-squares
# over the lane axis (padded H*W) and the in-block batch dim; the hw grid axis
# is a resident-output reduction ("arbitrary"), the batch-block axis is
# "parallel" (v7x dual-TC).  Finalize happens in the XLA epilogue.
# ----------------------------------------------------------------------------
def _stats_kernel(x_ref, sum_ref, sq_ref):
    @pl.when(pl.program_id(1) == 0)
    def _():
        sum_ref[...] = jnp.zeros_like(sum_ref)
        sq_ref[...] = jnp.zeros_like(sq_ref)

    xv = x_ref[...].astype(jnp.float32)                        # (bn, C, tile_hw)
    sum_ref[...] += jnp.sum(xv, axis=(0, 2), keepdims=True)    # (1, C, 1)
    sq_ref[...] += jnp.sum(xv * xv, axis=(0, 2), keepdims=True)


def _partial_stats(x3, *, bn, tile_hw, vmem_limit):
    n, c, hw_p = x3.shape
    nb = n // bn
    grid = (nb, hw_p // tile_hw)
    return pl.pallas_call(
        _stats_kernel,
        out_shape=(jax.ShapeDtypeStruct((nb, c, 1), jnp.float32),
                   jax.ShapeDtypeStruct((nb, c, 1), jnp.float32)),
        grid_spec=pltpu.PrefetchScalarGridSpec(
            num_scalar_prefetch=0,
            grid=grid,
            in_specs=[pl.BlockSpec((bn, c, tile_hw), lambda i, j: (i, 0, j))],
            out_specs=[pl.BlockSpec((1, c, 1), lambda i, j: (i, 0, 0)),
                       pl.BlockSpec((1, c, 1), lambda i, j: (i, 0, 0))],
        ),
        compiler_params=pltpu.CompilerParams(
            dimension_semantics=("parallel", "arbitrary"),
            vmem_limit_bytes=vmem_limit),
    )(x3)


# ----------------------------------------------------------------------------
# Kernel 2: streaming elementwise y = x * scale[c]
# scale arrives pre-cast (bf16 for bf16 inputs, f32 otherwise): no per-vreg casts.
# ----------------------------------------------------------------------------
def _apply_kernel(x_ref, scale_ref, o_ref):
    o_ref[...] = (x_ref[...] * scale_ref[...]).astype(o_ref.dtype)


def _apply_scale(x3, scale, *, bn, tile_hw, vmem_limit):
    n, c, hw_p = x3.shape
    grid = (n // bn, hw_p // tile_hw)
    return pl.pallas_call(
        _apply_kernel,
        out_shape=jax.ShapeDtypeStruct((n, c, hw_p), x3.dtype),
        grid_spec=pltpu.PrefetchScalarGridSpec(
            num_scalar_prefetch=0,
            grid=grid,
            in_specs=[
                # TODO(synk): sweep pipeline_mode=pl.Buffered(3) here if xprof
                # shows exposed input-fetch / output-writeback serialization.
                pl.BlockSpec((bn, c, tile_hw), lambda i, j: (i, 0, j)),
                pl.BlockSpec((c, 1), lambda i, j: (0, 0)),
            ],
            out_specs=pl.BlockSpec((bn, c, tile_hw), lambda i, j: (i, 0, j)),
        ),
        compiler_params=pltpu.CompilerParams(
            dimension_semantics=("parallel", "parallel"),
            vmem_limit_bytes=vmem_limit),
    )(x3, scale)


# ----------------------------------------------------------------------------
# Wrapper mirroring BF_batchNorm.forward (functional running_sd update)
# ----------------------------------------------------------------------------
def bf_batchnorm_forward(x_nchw, gammas, running_sd, *, training=True, eps=1e-5):
    """x_nchw: (N, C, H, W). gammas/running_sd: (1, C, 1, 1).

    Returns (y_nchw, new_running_sd)."""
    n, c, h, w = x_nchw.shape
    hw = h * w
    x3 = x_nchw.reshape(n, c, hw)              # free reshape, no transpose
    g = gammas.reshape(c, 1).astype(jnp.float32)
    rsd = running_sd.reshape(c, 1).astype(jnp.float32)

    # Lane-dense padding: zeros don't change sum/sumsq; count below is exact.
    hw_p = ((hw + 127) // 128) * 128
    if hw_p != hw:
        x3 = jnp.pad(x3, ((0, 0), (0, 0), (0, hw_p - hw)))

    block_budget, vmem_limit = _vmem_budgets()
    bn, tile_hw = _pick_block(n, c, hw_p, jnp.dtype(x3.dtype).itemsize,
                              block_budget)

    if training:
        psum, psq = _partial_stats(x3, bn=bn, tile_hw=tile_hw,
                                   vmem_limit=vmem_limit)
        count = jnp.float32(n * hw)                      # true count (no pads)
        mean = jnp.sum(psum, axis=0) / count             # (C, 1)
        # TODO(synk): shifted (pivoted) accumulation if inputs are far from
        # zero-mean; E[x^2]-E[x]^2 in f32 can cancel catastrophically.
        var = jnp.maximum(jnp.sum(psq, axis=0) / count - mean * mean, 0.0)
        sd = jnp.sqrt(var + eps)
        scale = g * jax.lax.rsqrt(var + eps)
        new_rsd = 0.9 * rsd + 0.1 * sd
    else:
        scale = g / rsd
        new_rsd = rsd

    # bf16 fast path (native bf16 VALU on v6e/v7x; Mosaic widens on v5e).
    scale_dtype = jnp.bfloat16 if x3.dtype == jnp.bfloat16 else jnp.float32
    y3 = _apply_scale(x3, scale.astype(scale_dtype), bn=bn, tile_hw=tile_hw,
                      vmem_limit=vmem_limit)
    if hw_p != hw:
        y3 = y3[:, :, :hw]
    return y3.reshape(n, c, h, w), new_rsd.reshape(1, c, 1, 1)


# ----------------------------------------------------------------------------
# Pure-JAX reference for verification
# ----------------------------------------------------------------------------
def _ref_forward(x, gammas, running_sd, training=True):
    var = jnp.var(x, axis=(0, 2, 3), keepdims=True)      # biased (unbiased=False)
    sd = jnp.sqrt(var + 1e-5)
    if training:
        y = x / sd * gammas
        new_rsd = 0.9 * running_sd + 0.1 * sd
    else:
        y = x / running_sd * gammas
        new_rsd = running_sd
    return y, new_rsd


if __name__ == "__main__":
    key = jax.random.PRNGKey(0)
    k_x, k_g, k_p = jax.random.split(key, 3)

    N, C, H, W = 2, 4, 16, 16
    x = jax.random.normal(k_x, (N, C, H, W), dtype=jnp.float32)

    # Deterministic parameter init matching __init__:
    #   gammas = clamp(randn(1,C,1,1) * (2/9/64), -0.025, 0.025)
    gammas = jnp.clip(
        jax.random.normal(k_g, (1, C, 1, 1), dtype=jnp.float32) * (2.0 / 9.0 / 64.0),
        -0.025, 0.025)
    running_sd = jnp.ones((1, C, 1, 1), dtype=jnp.float32)

    # 1) Training-mode forward (module default)
    y, new_rsd = bf_batchnorm_forward(x, gammas, running_sd, training=True)
    y = jax.block_until_ready(y)
    new_rsd = jax.block_until_ready(new_rsd)
    y_ref, rsd_ref = _ref_forward(x, gammas, running_sd, training=True)
    assert jnp.allclose(y, y_ref, atol=1e-5, rtol=1e-5)
    assert jnp.allclose(new_rsd, rsd_ref, atol=1e-5, rtol=1e-5)

    # 2) Eval-mode forward
    y_eval, _ = bf_batchnorm_forward(x, gammas, new_rsd, training=False)
    y_eval = jax.block_until_ready(y_eval)
    y_eval_ref, _ = _ref_forward(x, gammas, new_rsd, training=False)
    assert jnp.allclose(y_eval, y_eval_ref, atol=1e-5, rtol=1e-5)

    # 3) Non-128-multiple spatial size (exercises the zero-pad path)
    Hp, Wp = 10, 10                                   # H*W = 100 -> padded to 128
    xp = jax.random.normal(k_p, (N, C, Hp, Wp), dtype=jnp.float32)
    yp, rsd_p = bf_batchnorm_forward(xp, gammas, running_sd, training=True)
    yp = jax.block_until_ready(yp)
    yp_ref, rsd_p_ref = _ref_forward(xp, gammas, running_sd, training=True)
    assert jnp.allclose(yp, yp_ref, atol=1e-5, rtol=1e-5)
    assert jnp.allclose(rsd_p, rsd_p_ref, atol=1e-5, rtol=1e-5)

    # 4) bf16 inputs (apply multiply stays in bf16)
    xb = x.astype(jnp.bfloat16)
    yb, _ = bf_batchnorm_forward(xb, gammas, running_sd, training=True)
    yb = jax.block_until_ready(yb)
    yb_ref, _ = _ref_forward(xb.astype(jnp.float32), gammas, running_sd, training=True)
    assert jnp.allclose(yb.astype(jnp.float32), yb_ref, atol=1e-3, rtol=2e-2)

    print("KERNEL_OK")
</pallas_src>

<mosaic_0001>
module attributes {stable_mosaic.version = 11 : i64} {
  func.func @_stats_kernel(%arg0: i32, %arg1: i32, %arg2: memref<1x4x256xf32, #tpu.memory_space<vmem>>, %arg3: memref<1x4x1xf32, #tpu.memory_space<vmem>>, %arg4: memref<1x4x1xf32, #tpu.memory_space<vmem>>) attributes {dimension_semantics = [#tpu.dimension_semantics<parallel>, #tpu.dimension_semantics<arbitrary>], iteration_bounds = array<i64: 2, 1>, scalar_prefetch = 0 : i64, scratch_operands = 0 : i64, tpu.core_type = #tpu.core_type<tc>, window_params = [{transform_indices = @transform_0, window_bounds = array<i64: 1, 4, 256>}, {transform_indices = @transform_1, window_bounds = array<i64: 1, 4, 1>}, {transform_indices = @transform_2, window_bounds = array<i64: 1, 4, 1>}]} {
    %c0_i32 = arith.constant 0 : i32
    %0 = arith.cmpi eq, %arg1, %c0_i32 : i32
    %1 = arith.extui %0 : i1 to i32
    %c0_i32_0 = arith.constant 0 : i32
    %2 = arith.cmpi ne, %1, %c0_i32_0 : i32
    scf.if %2 {
      %cst_16 = arith.constant 0.000000e+00 : f32
      %15 = vector.broadcast %cst_16 : f32 to vector<1x4x1xf32>
      %c0_17 = arith.constant 0 : index
      %c0_18 = arith.constant 0 : index
      %c0_19 = arith.constant 0 : index
      %16 = vector.load %arg3[%c0_17, %c0_18, %c0_19] : memref<1x4x1xf32, #tpu.memory_space<vmem>>, vector<1x4x1xf32>
      tpu.vector_store %arg3[%c0_17, %c0_18, %c0_19], %15 {strides = array<i32>} : memref<1x4x1xf32, #tpu.memory_space<vmem>>, vector<1x4x1xf32>,
      %cst_20 = arith.constant 0.000000e+00 : f32
      %17 = vector.broadcast %cst_20 : f32 to vector<1x4x1xf32>
      %c0_21 = arith.constant 0 : index
      %c0_22 = arith.constant 0 : index
      %c0_23 = arith.constant 0 : index
      %18 = vector.load %arg4[%c0_21, %c0_22, %c0_23] : memref<1x4x1xf32, #tpu.memory_space<vmem>>, vector<1x4x1xf32>
      tpu.vector_store %arg4[%c0_21, %c0_22, %c0_23], %17 {strides = array<i32>} : memref<1x4x1xf32, #tpu.memory_space<vmem>>, vector<1x4x1xf32>,
    } else {
    }
    %c0 = arith.constant 0 : index
    %c0_1 = arith.constant 0 : index
    %c0_2 = arith.constant 0 : index
    %3 = vector.load %arg2[%c0, %c0_1, %c0_2] : memref<1x4x256xf32, #tpu.memory_space<vmem>>, vector<1x4x256xf32>
    %c0_3 = arith.constant 0 : index
    %c0_4 = arith.constant 0 : index
    %c0_5 = arith.constant 0 : index
    %4 = vector.load %arg3[%c0_3, %c0_4, %c0_5] : memref<1x4x1xf32, #tpu.memory_space<vmem>>, vector<1x4x1xf32>
    %cst = arith.constant dense<0.000000e+00> : vector<4xf32>
    %5 = vector.multi_reduction <add>, %3, %cst [0, 2] : vector<1x4x256xf32> to vector<4xf32>
    %6 = vector.shape_cast %5 : vector<4xf32> to vector<1x4x1xf32>
    %7 = arith.addf %4, %6 : vector<1x4x1xf32>
    %c0_6 = arith.constant 0 : index
    %c0_7 = arith.constant 0 : index
    %c0_8 = arith.constant 0 : index
    %8 = vector.load %arg3[%c0_6, %c0_7, %c0_8] : memref<1x4x1xf32, #tpu.memory_space<vmem>>, vector<1x4x1xf32>
    tpu.vector_store %arg3[%c0_6, %c0_7, %c0_8], %7 {strides = array<i32>} : memref<1x4x1xf32, #tpu.memory_space<vmem>>, vector<1x4x1xf32>,
    %c0_9 = arith.constant 0 : index
    %c0_10 = arith.constant 0 : index
    %c0_11 = arith.constant 0 : index
    %9 = vector.load %arg4[%c0_9, %c0_10, %c0_11] : memref<1x4x1xf32, #tpu.memory_space<vmem>>, vector<1x4x1xf32>
    %10 = arith.mulf %3, %3 : vector<1x4x256xf32>
    %cst_12 = arith.constant dense<0.000000e+00> : vector<4xf32>
    %11 = vector.multi_reduction <add>, %10, %cst_12 [0, 2] : vector<1x4x256xf32> to vector<4xf32>
    %12 = vector.shape_cast %11 : vector<4xf32> to vector<1x4x1xf32>
    %13 = arith.addf %9, %12 : vector<1x4x1xf32>
    %c0_13 = arith.constant 0 : index
    %c0_14 = arith.constant 0 : index
    %c0_15 = arith.constant 0 : index
    %14 = vector.load %arg4[%c0_13, %c0_14, %c0_15] : memref<1x4x1xf32, #tpu.memory_space<vmem>>, vector<1x4x1xf32>
    tpu.vector_store %arg4[%c0_13, %c0_14, %c0_15], %13 {strides = array<i32>} : memref<1x4x1xf32, #tpu.memory_space<vmem>>, vector<1x4x1xf32>,
    return
  }
  func.func @transform_0(%arg0: i32, %arg1: i32) -> (i32, i32, i32) {
    %c0_i32 = arith.constant 0 : i32
    %c0_i32_0 = arith.constant 0 : i32
    return %arg0, %c0_i32, %arg1 : i32, i32, i32
  }
  func.func @transform_1(%arg0: i32, %arg1: i32) -> (i32, i32, i32) {
    %c0_i32 = arith.constant 0 : i32
    %c0_i32_0 = arith.constant 0 : i32
    %c0_i32_1 = arith.constant 0 : i32
    return %arg0, %c0_i32, %c0_i32_0 : i32, i32, i32
  }
  func.func @transform_2(%arg0: i32, %arg1: i32) -> (i32, i32, i32) {
    %c0_i32 = arith.constant 0 : i32
    %c0_i32_0 = arith.constant 0 : i32
    %c0_i32_1 = arith.constant 0 : i32
    return %arg0, %c0_i32, %c0_i32_0 : i32, i32, i32
  }
}

</mosaic_0001>

<llo_original>
// kernel: tpu_custom_call.1
$region0: #{tpu_custom_call.1}
  #allocation0 [shape = 'u32[]', space=smem, size = 0x4, offset = 0x4, fixed_abs, tag = 'smem constant byte address 0x4 - core index']
  #allocation1 [shape = 'u32[144,128]{1,0:T(1,128)}', space=vmem, size = 0x12000, scoped, tag = 'internal scratch']
  %s0 = inlined_call_operand.hbm [shape: f32[2,4,256], index: 0, kind: input, shape index: {}]
  %s1 = inlined_call_operand.hbm [shape: f32[2,4,1], index: 1, kind: output, shape index: {0}]
  %s2 = inlined_call_operand.hbm [shape: f32[2,4,1], index: 2, kind: output, shape index: {1}]
  %3 = xla_tuple %s1, %s2
  %s4 = sld [smem:[#allocation0]]
  $region53: #{tpu_custom_call.1} parent=0
    _
  %s6 = ssub.s32 1, %s4
  %s7 = scalar_select 0, %s6, %s4
  $region1: #{tpu_custom_call.1} parent=0
    #allocation2 [shape = 'u8[8192]{0}', space=vmem, size = 0x2000, scoped, tag = 'input window, operand 0']
    #allocation3 [shape = 's32[2]{0}', space=sflag, size = 0x8, scoped, tag = 'scoped memory for tpu_custom_call.1']
    #allocation4 [shape = 's32[2]{0}', space=sflag, size = 0x8, scoped, tag = 'scoped memory for tpu_custom_call.1']
    #allocation5 [shape = 'u8[4096]{0}', space=vmem, size = 0x1000, scoped, tag = 'output window, operand 0']
    #allocation6 [shape = 'u8[4096]{0}', space=vmem, size = 0x1000, scoped, tag = 'output window, operand 1']
    #allocation7 [shape = 's32[2]{0}', space=sflag, size = 0x8, scoped, tag = 'scoped memory for tpu_custom_call.1']
    %8 = vsyncpa [#allocation3], 0
    %s9 = scalar_lea.sflag [#allocation3], 1
    %10 = vsyncpa %s9, 0
    %11 = vsyncpa [#allocation4], 0
    %s12 = scalar_lea.sflag [#allocation4], 1
    %13 = vsyncpa %s12, 0
    %14 = vsyncpa [#allocation7], 0
    %s15 = scalar_lea.sflag [#allocation7], 1
    %16 = vsyncpa %s15, 0
    loop: start=0, step=1, limit=4
    $region2: #{tpu_custom_call.1} parent=1 // loop_pre_header
      _
    $region3: #{tpu_custom_call.1} parent=1 // loop_header
      %s18 = sphi 0, %s22
      %p19 = scmp.ge.s32.totalorder %s18, 4
      %s25 = sphi 0, %s37
      %s26 = sphi 0, %s33
      %s27 = sphi 0, %s25
      %s28 = sphi 0, %s26
      %s29 = sphi 0, %s27
      %s30 = sphi 0, %s28
      %s42 = sphi 0, %s44
      %s45 = sphi 0, %s42
      %s46 = sphi 0, %s45
      %s62 = sphi 0, %s46
      %s68 = sphi 0, %s70
      %s71 = sphi 0, %s68
      %s72 = sphi 0, %s71
      %s88 = sphi 0, %s72
      %s94 = sphi 0, %s96
      %s97 = sphi 0, %s94
      %s98 = sphi 0, %s97
      %s114 = sphi 0, %s98
    $region4: #{tpu_custom_call.1} parent=1 // loop_header_branch
      %21 = sbr.rel (%p19) target = $region8
    $region5: #{tpu_custom_call.1} parent=1 // loop_body
      %s23 = ssub.s32 %s18, 1
      %s24 = ssub.s32 %s18, 2
      %s31 = sadd.s32 1, %s26
      %p32 = scmp.ge.s32.totalorder %s31, 1
      %s33 = scalar_select %p32, 0, %s31
      %s34 = sadd.s32 1, %s25
      %s35 = scalar_select %p32, %s34, %s25
      %p36 = scmp.ge.s32.totalorder %s35, 2
      %s37 = scalar_select %p36, 0, %s35
      %s38 = ssub.s32 %s25, %s37
      %s39 = ssub.s32 %s26, %s33
      %s40 = sor.u32 %s38, %s39
      %p41 = scmp.eq.s32.totalorder %s40, 0
      %s43 = sadd.s32 %s42, 1
      %s44 = scalar_select %p41, %s42, %s43
      %p47 = pneg %p41
      %p48 = scmp.eq.s32.totalorder %s18, 1
      %p49 = por %p47, %p48
      %p50 = scmp.ne.s32.totalorder %s42, %s45
      %p51 = scmp.eq.s32.totalorder %s18, 0
      %p52 = por %p50, %p51
      %p53 = scmp.ne.s32.totalorder %s42, %s45
      %p54 = scmp.eq.s32.totalorder %s23, 1
      %p55 = por %p53, %p54
      %p56 = scmp.ne.s32.totalorder %s45, %s46
      %p57 = scmp.eq.s32.totalorder %s23, 0
      %p58 = por %p56, %p57
      %p59 = scmp.ne.s32.totalorder %s45, %s46
      %p60 = scmp.eq.s32.totalorder %s24, 1
      %p61 = por %p59, %p60
      %p63 = scmp.ne.s32.totalorder %s46, %s62
      %p64 = scmp.eq.s32.totalorder %s24, 0
      %p65 = por %p63, %p64
      %s66 = ssub.s32 %s25, %s37
      %p67 = scmp.eq.s32.totalorder %s66, 0
      %s69 = sadd.s32 %s68, 1
      %s70 = scalar_select %p67, %s68, %s69
      %p73 = pneg %p67
      %p74 = scmp.eq.s32.totalorder %s18, 1
      %p75 = por %p73, %p74
      %p76 = scmp.ne.s32.totalorder %s68, %s71
      %p77 = scmp.eq.s32.totalorder %s18, 0
      %p78 = por %p76, %p77
      %p79 = scmp.ne.s32.totalorder %s68, %s71
      %p80 = scmp.eq.s32.totalorder %s23, 1
      %p81 = por %p79, %p80
      %p82 = scmp.ne.s32.totalorder %s71, %s72
      %p83 = scmp.eq.s32.totalorder %s23, 0
      %p84 = por %p82, %p83
      %p85 = scmp.ne.s32.totalorder %s71, %s72
      %p86 = scmp.eq.s32.totalorder %s24, 1
      %p87 = por %p85, %p86
      %p89 = scmp.ne.s32.totalorder %s72, %s88
      %p90 = scmp.eq.s32.totalorder %s24, 0
      %p91 = por %p89, %p90
      %s92 = ssub.s32 %s25, %s37
      %p93 = scmp.eq.s32.totalorder %s92, 0
      %s95 = sadd.s32 %s94, 1
      %s96 = scalar_select %p93, %s94, %s95
      %p99 = pneg %p93
      %p100 = scmp.eq.s32.totalorder %s18, 1
      %p101 = por %p99, %p100
      %p102 = scmp.ne.s32.totalorder %s94, %s97
      %p103 = scmp.eq.s32.totalorder %s18, 0
      %p104 = por %p102, %p103
      %p105 = scmp.ne.s32.totalorder %s94, %s97
      %p106 = scmp.eq.s32.totalorder %s23, 1
      %p107 = por %p105, %p106
      %p108 = scmp.ne.s32.totalorder %s97, %s98
      %p109 = scmp.eq.s32.totalorder %s23, 0
      %p110 = por %p108, %p109
      %p111 = scmp.ne.s32.totalorder %s97, %s98
      %p112 = scmp.eq.s32.totalorder %s24, 1
      %p113 = por %p111, %p112
      %p115 = scmp.ne.s32.totalorder %s98, %s114
      %p116 = scmp.eq.s32.totalorder %s24, 0
      %p117 = por %p115, %p116
      %p118 = scmp.le.s32.totalorder 1, %s18
      %p119 = scmp.lt.s32.totalorder %s18, 3
      %p120 = pnand %p118, %p119
      %p121 = pneg %p120
      // Predicated region
      $region9: #{tpu_custom_call.1} parent=5 // pred_check
        _
      $region10: #{tpu_custom_call.1} parent=5 // pred_check_branch
        %123 = sbr.rel (%p120) target = $region12
      $region11: #{tpu_custom_call.1} parent=5 // pred_region
        %s124 = ssub.s32 %s18, 1
      $region12: #{tpu_custom_call.1} parent=5 // pred_fallthru
        _
      %p125 = scmp.lt.s32.totalorder %s18, 2
      // Predicated region
      $region13: #{tpu_custom_call.1} parent=5 // pred_check
        %p126 = pneg %p125
      $region14: #{tpu_custom_call.1} parent=5 // pred_check_branch
        %128 = sbr.rel (%p126) target = $region16
      $region15: #{tpu_custom_call.1} parent=5 // pred_region
        // Predicated region
        $region17: #{tpu_custom_call.1} parent=15 // pred_check
          %p129 = pneg %p52
        $region18: #{tpu_custom_call.1} parent=15 // pred_check_branch
          %131 = sbr.rel (%p129) target = $region20
        $region19: #{tpu_custom_call.1} parent=15 // pred_region
          %s132 = sand.u32 %s42, 1
          %s133 = scalar_lea.sflag [#allocation3], %s132
          %s134 = sand.u32 %s42, 1
          %s135 = smul.addr %s134, 8
          %s136 = scalar_lea.vmem [#allocation2], %s135
          %s137 = smul.u32 2, %s26
          %s139 = ssub.s32 128, 128
          %140 = vsyncadd %s133, %s139
          %s141 = smul.addr %s25, 2
          %s142 = sadd.s32 %s137, %s141
          %s143 = smul.addr %s142, 64
          %s144 = scalar_lea.hbm %s0, %s143
          %s146 = sshll.u32 %s136, 4
          %s147 = int_to_ptr.vmem [resolvable:$true] %s146
          %149 = dma.hbm_to_vmem [thread:$0]  %s144, 128, %s147, %s133
        $region20: #{tpu_custom_call.1} parent=15 // pred_fallthru
          _
      $region16: #{tpu_custom_call.1} parent=5 // pred_fallthru
        _
      %p150 = scmp.le.s32.totalorder 1, %s18
      %p151 = scmp.lt.s32.totalorder %s18, 3
      %p152 = pnand %p150, %p151
      %p153 = pneg %p152
      // Predicated region
      $region21: #{tpu_custom_call.1} parent=5 // pred_check
        _
      $region22: #{tpu_custom_call.1} parent=5 // pred_check_branch
        %155 = sbr.rel (%p152) target = $region24
      $region23: #{tpu_custom_call.1} parent=5 // pred_region
        %s156 = ssub.s32 %s18, 1
        %s157 = sand.u32 %s45, 1
        %s158 = scalar_lea.sflag [#allocation3], %s157
        %s159 = sand.u32 %s45, 1
        %s160 = smul.addr %s159, 8
        %s161 = scalar_lea.vmem [#allocation2], %s160
        // Predicated region
        $region25: #{tpu_custom_call.1} parent=23 // pred_check
          %p162 = pneg %p58
        $region26: #{tpu_custom_call.1} parent=23 // pred_check_branch
          %164 = sbr.rel (%p162) target = $region28
        $region27: #{tpu_custom_call.1} parent=23 // pred_region
          %165 = dma.done %s158, 128
        $region28: #{tpu_custom_call.1} parent=23 // pred_fallthru
          _
        %s166 = sand.u32 %s45, 1
        %s167 = scalar_lea.sflag [#allocation3], %s166
        %s168 = sand.u32 %s45, 1
        %s169 = smul.addr %s168, 8
        %s170 = scalar_lea.vmem [#allocation2], %s169
        %p171 = pneg %p58
        %p172 = pneg %p55
        %p173 = pneg %p84
        %p174 = pneg %p81
        %s175 = sand.u32 %s71, 1
        %s176 = scalar_lea.sflag [#allocation4], %s175
        %s177 = sand.u32 %s71, 1
        %s178 = smul.addr %s177, 4
        %s179 = scalar_lea.vmem [#allocation5], %s178
        %p180 = pneg %p110
        %p181 = pneg %p107
        %s182 = sand.u32 %s97, 1
        %s183 = scalar_lea.sflag [#allocation7], %s182
        %s184 = sand.u32 %s97, 1
        %s185 = smul.addr %s184, 4
        %s186 = scalar_lea.vmem [#allocation6], %s185
        %s187 = smul.u32 2, %s28
        %p188 = scmp.eq.s32.totalorder %s28, 0
        // Predicated region
        $region29: #{tpu_custom_call.1} parent=23 // pred_check
          %p189 = pneg %p188
        $region30: #{tpu_custom_call.1} parent=23 // pred_check_branch
          %191 = sbr.rel (%p189) target = $region32
        $region31: #{tpu_custom_call.1} parent=23 // pred_region
          %vm192 = vcmask 3072
          %193 = vst.msk [vmem:[%s179] sm:$0xf] %vm192, 0.0
          %194 = vst.msk [vmem:[%s186] sm:$0xf] %vm192, 0.0
        $region32: #{tpu_custom_call.1} parent=23 // pred_fallthru
          _
        %v195 = vld [vmem:[%s161] sm:$0xff]
        %v196 = vld [vmem:[%s179] sm:$0xf]
        %v198 = vcombine.high %v195, %v195
        %vm200 = vcmask 1043456
        %v201 = vsel %vm200, %v195, 0.0
        %v202 = vsel %vm200, %v198, 0.0
        %v203 = vadd.f32 %v201, %v202
        %204 = vadd.xlane.f32.xlu0 %v203
        %v205 = vpop.xlane.xlu0 %204
        %v206 = vadd.f32 %v196, %v205
        %vm207 = vcmask 3072
        %208 = vst.msk [vmem:[%s179] sm:$0xf] %vm207, %v206
        %v209 = vld [vmem:[%s186] sm:$0xf]
        %v210 = vmul.f32 %v195, %v195
        %v212 = vcombine.high %v210, %v210
        %v214 = vsel %vm200, %v210, 0.0
        %v215 = vsel %vm200, %v212, 0.0
        %v216 = vadd.f32 %v214, %v215
        %217 = vadd.xlane.f32.xlu0 %v216
        %v218 = vpop.xlane.xlu0 %217
        %v219 = vadd.f32 %v209, %v218
        %220 = vst.msk [vmem:[%s186] sm:$0xf] %vm207, %v219
        %s221 = sand.u32 %s71, 1
        %s222 = scalar_lea.sflag [#allocation4], %s221
        %s223 = sand.u32 %s71, 1
        %s224 = smul.addr %s223, 4
        %s225 = scalar_lea.vmem [#allocation5], %s224
        %s226 = sand.u32 %s97, 1
        %s227 = scalar_lea.sflag [#allocation7], %s226
        %s228 = sand.u32 %s97, 1
        %s229 = smul.addr %s228, 4
        %s230 = scalar_lea.vmem [#allocation6], %s229
        // Predicated region
        $region33: #{tpu_custom_call.1} parent=23 // pred_check
          %p231 = pneg %p81
        $region34: #{tpu_custom_call.1} parent=23 // pred_check_branch
          %233 = sbr.rel (%p231) target = $region36
        $region35: #{tpu_custom_call.1} parent=23 // pred_region
          %s235 = ssub.s32 64, 64
          %236 = vsyncadd %s222, %s235
          %s237 = smul.addr %s27, 64
          %s238 = scalar_lea.hbm %s1, %s237
          %s240 = sshll.u32 %s225, 4
          %s241 = int_to_ptr.vmem [resolvable:$true] %s240
          %243 = dma.vmem_to_hbm [thread:$0]  %s241, 64, %s238, %s222
        $region36: #{tpu_custom_call.1} parent=23 // pred_fallthru
          _
        // Predicated region
        $region37: #{tpu_custom_call.1} parent=23 // pred_check
          %p244 = pneg %p107
        $region38: #{tpu_custom_call.1} parent=23 // pred_check_branch
          %246 = sbr.rel (%p244) target = $region40
        $region39: #{tpu_custom_call.1} parent=23 // pred_region
          %s248 = ssub.s32 64, 64
          %249 = vsyncadd %s227, %s248
          %s250 = smul.addr %s27, 64
          %s251 = scalar_lea.hbm %s2, %s250
          %s253 = sshll.u32 %s230, 4
          %s254 = int_to_ptr.vmem [resolvable:$true] %s253
          %256 = dma.vmem_to_hbm [thread:$0]  %s254, 64, %s251, %s227
        $region40: #{tpu_custom_call.1} parent=23 // pred_fallthru
          _
      $region24: #{tpu_custom_call.1} parent=5 // pred_fallthru
        _
      %p257 = scmp.le.s32.totalorder 2, %s18
      // Predicated region
      $region41: #{tpu_custom_call.1} parent=5 // pred_check
        %p258 = pneg %p257
      $region42: #{tpu_custom_call.1} parent=5 // pred_check_branch
        %260 = sbr.rel (%p258) target = $region44
      $region43: #{tpu_custom_call.1} parent=5 // pred_region
        %s261 = ssub.s32 %s18, 2
        // Predicated region
        $region45: #{tpu_custom_call.1} parent=43 // pred_check
          %p262 = pneg %p87
        $region46: #{tpu_custom_call.1} parent=43 // pred_check_branch
          %264 = sbr.rel (%p262) target = $region48
        $region47: #{tpu_custom_call.1} parent=43 // pred_region
          %s265 = sand.u32 %s72, 1
          %s266 = scalar_lea.sflag [#allocation4], %s265
          %s267 = sand.u32 %s72, 1
          %s268 = smul.addr %s267, 4
          %s269 = scalar_lea.vmem [#allocation5], %s268
          %270 = dma.done %s266, 64
        $region48: #{tpu_custom_call.1} parent=43 // pred_fallthru
          _
        // Predicated region
        $region49: #{tpu_custom_call.1} parent=43 // pred_check
          %p271 = pneg %p113
        $region50: #{tpu_custom_call.1} parent=43 // pred_check_branch
          %273 = sbr.rel (%p271) target = $region52
        $region51: #{tpu_custom_call.1} parent=43 // pred_region
          %s274 = sand.u32 %s98, 1
          %s275 = scalar_lea.sflag [#allocation7], %s274
          %s276 = sand.u32 %s98, 1
          %s277 = smul.addr %s276, 4
          %s278 = scalar_lea.vmem [#allocation6], %s277
          %279 = dma.done %s275, 64
        $region52: #{tpu_custom_call.1} parent=43 // pred_fallthru
          _
      $region44: #{tpu_custom_call.1} parent=5 // pred_fallthru
        _
    $region6: #{tpu_custom_call.1} parent=1 // loop_footer
      %s22 = sadd.s32 1, %s18
    $region7: #{tpu_custom_call.1} parent=1 // loop_footer_branch
      %17 = sbr.rel target = $region3
    $region8: #{tpu_custom_call.1} parent=1 // loop_exit
      _
    %280 = vsyncpa [#allocation3], 1
    %s281 = scalar_lea.sflag [#allocation3], 1
    %282 = vsyncpa %s281, 1
    %283 = vsyncpa [#allocation4], 1
    %s284 = scalar_lea.sflag [#allocation4], 1
    %285 = vsyncpa %s284, 1
    %286 = vsyncpa [#allocation7], 1
    %s287 = scalar_lea.sflag [#allocation7], 1
    %288 = vsyncpa %s287, 1

</llo_original>
